<compile_context>
chip_gen: v7x
topology: tpu7x:2x2x1
jax: 0.10.0
libtpu: 0.0.40
codegen_flags: <defaults>
</compile_context>

<pallas_src>
import functools

import jax
import jax.numpy as jnp
from jax.experimental import pallas as pl
from jax.experimental.pallas import tpu as pltpu


def _rodrigues_tiles(tx, ty, tz):
    """batch_rodrigues (axis-angle -> rotmat via unit quaternion) on (R, 128) tiles.

    Matches the standard SPIN/VIBE implementation:
      angle = ||theta + 1e-8||, normalized = theta / angle,
      q = [cos(a/2), sin(a/2)*normalized], q /= ||q||, quat -> rotmat.
    Returns the 9 rotation-matrix entries, each (R, 128).
    """
    eps = jnp.float32(1e-8)
    ax, ay, az = tx + eps, ty + eps, tz + eps
    ssq = ax * ax + ay * ay + az * az
    inv_a = jax.lax.rsqrt(ssq)          # 1 / ||theta + eps||   (single EUP push)
    angle = ssq * inv_a                 # == sqrt(ssq), no extra EUP push
    nx, ny, nz = tx * inv_a, ty * inv_a, tz * inv_a
    half = angle * jnp.float32(0.5)
    w = jnp.cos(half)
    s = jnp.sin(half)
    qx, qy, qz = s * nx, s * ny, s * nz
    inv_qn = jax.lax.rsqrt(w * w + qx * qx + qy * qy + qz * qz)
    w, qx, qy, qz = w * inv_qn, qx * inv_qn, qy * inv_qn, qz * inv_qn
    w2, x2, y2, z2 = w * w, qx * qx, qy * qy, qz * qz
    wx, wy, wz = w * qx, w * qy, w * qz
    xy, xz, yz = qx * qy, qx * qz, qy * qz
    two = jnp.float32(2.0)
    return (
        w2 + x2 - y2 - z2, two * (xy - wz),     two * (wy + xz),
        two * (wz + xy),   w2 - x2 + y2 - z2,   two * (yz - wx),
        two * (xz - wy),   two * (wx + yz),     w2 - x2 - y2 + z2,
    )


def _smpl_loss_kernel(pose_ref, betas_ref, out_ref, *, n_rot_elems, n_beta_elems):
    # pose_ref : (6, R, 128) VMEM = [pred_x, pred_y, pred_z, gt_x, gt_y, gt_z]
    # betas_ref: (2, Bp, 128) VMEM = [pred_betas_padded, gt_betas_padded]
    # out_ref  : (1, 2) SMEM       = [pose_loss, betas_loss]
    p_rot = _rodrigues_tiles(pose_ref[0], pose_ref[1], pose_ref[2])
    g_rot = _rodrigues_tiles(pose_ref[3], pose_ref[4], pose_ref[5])

    # Single elementwise accumulator -> one cross-lane reduction at the end.
    acc = None
    for pr, gr in zip(p_rot, g_rot):
        d = pr - gr
        acc = d * d if acc is None else acc + d * d
    out_ref[0, 0] = jnp.sum(acc) / jnp.float32(n_rot_elems)

    db = betas_ref[0] - betas_ref[1]
    out_ref[0, 1] = jnp.sum(db * db) / jnp.float32(n_beta_elems)


@jax.jit
def smpl_loss(pred_rotmat, pred_betas, gt_pose, gt_betas, mask_3d=None):
    """Pallas equivalent of SMPLLoss.forward.
       pred_rotmat / gt_pose: (B, 72) axis-angle; pred_betas / gt_betas: (B, 10)."""
    B = pred_rotmat.shape[0]
    if B == 0:
        # PyTorch branch: len(pred_rotmat_valid) == 0 -> zero losses.
        return jnp.float32(0.0), jnp.float32(0.0)

    n = B * 24
    # Sublane-dense layout: n joints -> (rows, 128), rows a multiple of 8.
    rows = max(8, ((pl.cdiv(n, 128) + 7) // 8) * 8)
    n_pad = rows * 128

    # One fused prep on the stacked array: (2, B, 72) -> (2, n, 3) -> (2, 3, n) -> (6, n).
    both = jnp.stack([pred_rotmat, gt_pose], axis=0).astype(jnp.float32)
    comps = jnp.transpose(both.reshape(2, n, 3), (0, 2, 1)).reshape(6, n)
    # Zero padding: pred & gt padded columns both produce the same near-identity
    # rotmat, so they contribute exactly 0 to the squared-error sum (divisor n*9).
    pose_in = jnp.pad(comps, ((0, 0), (0, n_pad - n))).reshape(6, rows, 128)

    # Lane/sublane-dense betas slab: (2, Bp, 128) with zero padding (contributes 0).
    nb = pred_betas.shape[1]
    Bp = max(8, ((B + 7) // 8) * 8)
    betas_both = jnp.stack([pred_betas, gt_betas], axis=0).astype(jnp.float32)
    betas_in = jnp.pad(betas_both, ((0, 0), (0, Bp - B), (0, 128 - nb)))

    kernel = functools.partial(
        _smpl_loss_kernel,
        n_rot_elems=n * 9,            # B*24*3*3 elements for the pose MSE mean
        n_beta_elems=B * nb,          # B*10 elements for the betas MSE mean
    )
    losses = pl.pallas_call(
        kernel,
        out_shape=jax.ShapeDtypeStruct((1, 2), jnp.float32),
        in_specs=[pl.BlockSpec(memory_space=pltpu.MemorySpace.VMEM),
                  pl.BlockSpec(memory_space=pltpu.MemorySpace.VMEM)],
        out_specs=pl.BlockSpec(memory_space=pltpu.MemorySpace.SMEM),
    )(pose_in, betas_in)

    pose_loss = losses[0, 0]
    betas_loss = losses[0, 1]
    if mask_3d is not None:
        # PyTorch: (scalar * mask.unsqueeze(-1).unsqueeze(-1)).mean() == scalar * mask.mean()
        m = mask_3d.astype(jnp.float32).mean()
        pose_loss = pose_loss * m
        betas_loss = betas_loss * m
    return pose_loss, betas_loss


# ----------------------------- pure-JAX reference -----------------------------
def _batch_rodrigues_ref(theta):
    eps = 1e-8
    angle = jnp.sqrt(jnp.sum((theta + eps) ** 2, axis=1, keepdims=True))
    normalized = theta / angle
    half = angle * 0.5
    v_cos = jnp.cos(half)
    v_sin = jnp.sin(half)
    quat = jnp.concatenate([v_cos, v_sin * normalized], axis=1)
    quat = quat / jnp.linalg.norm(quat, axis=1, keepdims=True)
    w, x, y, z = quat[:, 0], quat[:, 1], quat[:, 2], quat[:, 3]
    w2, x2, y2, z2 = w * w, x * x, y * y, z * z
    wx, wy, wz = w * x, w * y, w * z
    xy, xz, yz = x * y, x * z, y * z
    rot = jnp.stack([
        w2 + x2 - y2 - z2, 2 * xy - 2 * wz,     2 * wy + 2 * xz,
        2 * wz + 2 * xy,   w2 - x2 + y2 - z2,   2 * yz - 2 * wx,
        2 * xz - 2 * wy,   2 * wx + 2 * yz,     w2 - x2 - y2 + z2,
    ], axis=1)
    return rot.reshape(-1, 3, 3)


def _smpl_loss_ref(pred_rotmat, pred_betas, gt_pose, gt_betas):
    pr = _batch_rodrigues_ref(pred_rotmat.reshape(-1, 3)).reshape(-1, 24, 3, 3)
    gr = _batch_rodrigues_ref(gt_pose.reshape(-1, 3)).reshape(-1, 24, 3, 3)
    return jnp.mean((pr - gr) ** 2), jnp.mean((pred_betas - gt_betas) ** 2)


if __name__ == "__main__":
    key = jax.random.PRNGKey(0)
    k1, k2, k3, k4 = jax.random.split(key, 4)
    B = 2
    pred_pose = jax.random.normal(k1, (B, 72), jnp.float32) * 0.3
    gt_pose = jax.random.normal(k2, (B, 72), jnp.float32) * 0.3
    pred_betas = jax.random.normal(k3, (B, 10), jnp.float32)
    gt_betas = jax.random.normal(k4, (B, 10), jnp.float32)

    pose_loss, betas_loss = smpl_loss(pred_pose, pred_betas, gt_pose, gt_betas)
    jax.block_until_ready((pose_loss, betas_loss))

    ref_pose, ref_betas = _smpl_loss_ref(pred_pose, pred_betas, gt_pose, gt_betas)
    assert jnp.allclose(pose_loss, ref_pose, rtol=1e-4, atol=1e-6), (pose_loss, ref_pose)
    assert jnp.allclose(betas_loss, ref_betas, rtol=1e-4, atol=1e-6), (betas_loss, ref_betas)

    # also exercise the mask_3d path
    mask = jnp.array([1.0, 0.0], jnp.float32)
    mp, mb = smpl_loss(pred_pose, pred_betas, gt_pose, gt_betas, mask)
    jax.block_until_ready((mp, mb))
    assert jnp.allclose(mp, ref_pose * mask.mean(), rtol=1e-4, atol=1e-6)
    assert jnp.allclose(mb, ref_betas * mask.mean(), rtol=1e-4, atol=1e-6)

    print("KERNEL_OK")
</pallas_src>

<mosaic_0001>
module attributes {stable_mosaic.version = 11 : i64} {
  func.func @_smpl_loss_kernel(%arg0: memref<6x8x128xf32, #tpu.memory_space<vmem>>, %arg1: memref<2x8x128xf32, #tpu.memory_space<vmem>>, %arg2: memref<1x2xf32, #tpu.memory_space<smem>>) attributes {dimension_semantics = [], scalar_prefetch = 0 : i64, scratch_operands = 0 : i64, tpu.core_type = #tpu.core_type<tc>} {
    %c0 = arith.constant 0 : index
    %c0_0 = arith.constant 0 : index
    %c0_1 = arith.constant 0 : index
    %0 = vector.load %arg0[%c0, %c0_0, %c0_1] : memref<6x8x128xf32, #tpu.memory_space<vmem>>, vector<1x8x128xf32>
    %1 = vector.shape_cast %0 : vector<1x8x128xf32> to vector<8x128xf32>
    %c1 = arith.constant 1 : index
    %c0_2 = arith.constant 0 : index
    %c0_3 = arith.constant 0 : index
    %2 = vector.load %arg0[%c1, %c0_2, %c0_3] : memref<6x8x128xf32, #tpu.memory_space<vmem>>, vector<1x8x128xf32>
    %3 = vector.shape_cast %2 : vector<1x8x128xf32> to vector<8x128xf32>
    %c2 = arith.constant 2 : index
    %c0_4 = arith.constant 0 : index
    %c0_5 = arith.constant 0 : index
    %4 = vector.load %arg0[%c2, %c0_4, %c0_5] : memref<6x8x128xf32, #tpu.memory_space<vmem>>, vector<1x8x128xf32>
    %5 = vector.shape_cast %4 : vector<1x8x128xf32> to vector<8x128xf32>
    %cst = arith.constant 9.99999993E-9 : f32
    %6 = vector.broadcast %cst : f32 to vector<8x128xf32>
    %7 = arith.addf %1, %6 : vector<8x128xf32>
    %cst_6 = arith.constant 9.99999993E-9 : f32
    %8 = vector.broadcast %cst_6 : f32 to vector<8x128xf32>
    %9 = arith.addf %3, %8 : vector<8x128xf32>
    %cst_7 = arith.constant 9.99999993E-9 : f32
    %10 = vector.broadcast %cst_7 : f32 to vector<8x128xf32>
    %11 = arith.addf %5, %10 : vector<8x128xf32>
    %12 = arith.mulf %7, %7 : vector<8x128xf32>
    %13 = arith.mulf %9, %9 : vector<8x128xf32>
    %14 = arith.addf %12, %13 : vector<8x128xf32>
    %15 = arith.mulf %11, %11 : vector<8x128xf32>
    %16 = arith.addf %14, %15 : vector<8x128xf32>
    %17 = math.rsqrt %16 : vector<8x128xf32>
    %18 = arith.mulf %16, %17 : vector<8x128xf32>
    %19 = arith.mulf %1, %17 : vector<8x128xf32>
    %20 = arith.mulf %3, %17 : vector<8x128xf32>
    %21 = arith.mulf %5, %17 : vector<8x128xf32>
    %cst_8 = arith.constant 5.000000e-01 : f32
    %22 = vector.broadcast %cst_8 : f32 to vector<8x128xf32>
    %23 = arith.mulf %18, %22 : vector<8x128xf32>
    %24 = math.cos %23 : vector<8x128xf32>
    %25 = math.sin %23 : vector<8x128xf32>
    %26 = arith.mulf %25, %19 : vector<8x128xf32>
    %27 = arith.mulf %25, %20 : vector<8x128xf32>
    %28 = arith.mulf %25, %21 : vector<8x128xf32>
    %29 = arith.mulf %24, %24 : vector<8x128xf32>
    %30 = arith.mulf %26, %26 : vector<8x128xf32>
    %31 = arith.addf %29, %30 : vector<8x128xf32>
    %32 = arith.mulf %27, %27 : vector<8x128xf32>
    %33 = arith.addf %31, %32 : vector<8x128xf32>
    %34 = arith.mulf %28, %28 : vector<8x128xf32>
    %35 = arith.addf %33, %34 : vector<8x128xf32>
    %36 = math.rsqrt %35 : vector<8x128xf32>
    %37 = arith.mulf %24, %36 : vector<8x128xf32>
    %38 = arith.mulf %26, %36 : vector<8x128xf32>
    %39 = arith.mulf %27, %36 : vector<8x128xf32>
    %40 = arith.mulf %28, %36 : vector<8x128xf32>
    %41 = arith.mulf %37, %37 : vector<8x128xf32>
    %42 = arith.mulf %38, %38 : vector<8x128xf32>
    %43 = arith.mulf %39, %39 : vector<8x128xf32>
    %44 = arith.mulf %40, %40 : vector<8x128xf32>
    %45 = arith.mulf %37, %38 : vector<8x128xf32>
    %46 = arith.mulf %37, %39 : vector<8x128xf32>
    %47 = arith.mulf %37, %40 : vector<8x128xf32>
    %48 = arith.mulf %38, %39 : vector<8x128xf32>
    %49 = arith.mulf %38, %40 : vector<8x128xf32>
    %50 = arith.mulf %39, %40 : vector<8x128xf32>
    %51 = arith.addf %41, %42 : vector<8x128xf32>
    %52 = arith.subf %51, %43 : vector<8x128xf32>
    %53 = arith.subf %52, %44 : vector<8x128xf32>
    %54 = arith.subf %48, %47 : vector<8x128xf32>
    %cst_9 = arith.constant 2.000000e+00 : f32
    %55 = vector.broadcast %cst_9 : f32 to vector<8x128xf32>
    %56 = arith.mulf %55, %54 : vector<8x128xf32>
    %57 = arith.addf %46, %49 : vector<8x128xf32>
    %cst_10 = arith.constant 2.000000e+00 : f32
    %58 = vector.broadcast %cst_10 : f32 to vector<8x128xf32>
    %59 = arith.mulf %58, %57 : vector<8x128xf32>
    %60 = arith.addf %47, %48 : vector<8x128xf32>
    %cst_11 = arith.constant 2.000000e+00 : f32
    %61 = vector.broadcast %cst_11 : f32 to vector<8x128xf32>
    %62 = arith.mulf %61, %60 : vector<8x128xf32>
    %63 = arith.subf %41, %42 : vector<8x128xf32>
    %64 = arith.addf %63, %43 : vector<8x128xf32>
    %65 = arith.subf %64, %44 : vector<8x128xf32>
    %66 = arith.subf %50, %45 : vector<8x128xf32>
    %cst_12 = arith.constant 2.000000e+00 : f32
    %67 = vector.broadcast %cst_12 : f32 to vector<8x128xf32>
    %68 = arith.mulf %67, %66 : vector<8x128xf32>
    %69 = arith.subf %49, %46 : vector<8x128xf32>
    %cst_13 = arith.constant 2.000000e+00 : f32
    %70 = vector.broadcast %cst_13 : f32 to vector<8x128xf32>
    %71 = arith.mulf %70, %69 : vector<8x128xf32>
    %72 = arith.addf %45, %50 : vector<8x128xf32>
    %cst_14 = arith.constant 2.000000e+00 : f32
    %73 = vector.broadcast %cst_14 : f32 to vector<8x128xf32>
    %74 = arith.mulf %73, %72 : vector<8x128xf32>
    %75 = arith.subf %41, %42 : vector<8x128xf32>
    %76 = arith.subf %75, %43 : vector<8x128xf32>
    %77 = arith.addf %76, %44 : vector<8x128xf32>
    %c3 = arith.constant 3 : index
    %c0_15 = arith.constant 0 : index
    %c0_16 = arith.constant 0 : index
    %78 = vector.load %arg0[%c3, %c0_15, %c0_16] : memref<6x8x128xf32, #tpu.memory_space<vmem>>, vector<1x8x128xf32>
    %79 = vector.shape_cast %78 : vector<1x8x128xf32> to vector<8x128xf32>
    %c4 = arith.constant 4 : index
    %c0_17 = arith.constant 0 : index
    %c0_18 = arith.constant 0 : index
    %80 = vector.load %arg0[%c4, %c0_17, %c0_18] : memref<6x8x128xf32, #tpu.memory_space<vmem>>, vector<1x8x128xf32>
    %81 = vector.shape_cast %80 : vector<1x8x128xf32> to vector<8x128xf32>
    %c5 = arith.constant 5 : index
    %c0_19 = arith.constant 0 : index
    %c0_20 = arith.constant 0 : index
    %82 = vector.load %arg0[%c5, %c0_19, %c0_20] : memref<6x8x128xf32, #tpu.memory_space<vmem>>, vector<1x8x128xf32>
    %83 = vector.shape_cast %82 : vector<1x8x128xf32> to vector<8x128xf32>
    %cst_21 = arith.constant 9.99999993E-9 : f32
    %84 = vector.broadcast %cst_21 : f32 to vector<8x128xf32>
    %85 = arith.addf %79, %84 : vector<8x128xf32>
    %cst_22 = arith.constant 9.99999993E-9 : f32
    %86 = vector.broadcast %cst_22 : f32 to vector<8x128xf32>
    %87 = arith.addf %81, %86 : vector<8x128xf32>
    %cst_23 = arith.constant 9.99999993E-9 : f32
    %88 = vector.broadcast %cst_23 : f32 to vector<8x128xf32>
    %89 = arith.addf %83, %88 : vector<8x128xf32>
    %90 = arith.mulf %85, %85 : vector<8x128xf32>
    %91 = arith.mulf %87, %87 : vector<8x128xf32>
    %92 = arith.addf %90, %91 : vector<8x128xf32>
    %93 = arith.mulf %89, %89 : vector<8x128xf32>
    %94 = arith.addf %92, %93 : vector<8x128xf32>
    %95 = math.rsqrt %94 : vector<8x128xf32>
    %96 = arith.mulf %94, %95 : vector<8x128xf32>
    %97 = arith.mulf %79, %95 : vector<8x128xf32>
    %98 = arith.mulf %81, %95 : vector<8x128xf32>
    %99 = arith.mulf %83, %95 : vector<8x128xf32>
    %cst_24 = arith.constant 5.000000e-01 : f32
    %100 = vector.broadcast %cst_24 : f32 to vector<8x128xf32>
    %101 = arith.mulf %96, %100 : vector<8x128xf32>
    %102 = math.cos %101 : vector<8x128xf32>
    %103 = math.sin %101 : vector<8x128xf32>
    %104 = arith.mulf %103, %97 : vector<8x128xf32>
    %105 = arith.mulf %103, %98 : vector<8x128xf32>
    %106 = arith.mulf %103, %99 : vector<8x128xf32>
    %107 = arith.mulf %102, %102 : vector<8x128xf32>
    %108 = arith.mulf %104, %104 : vector<8x128xf32>
    %109 = arith.addf %107, %108 : vector<8x128xf32>
    %110 = arith.mulf %105, %105 : vector<8x128xf32>
    %111 = arith.addf %109, %110 : vector<8x128xf32>
    %112 = arith.mulf %106, %106 : vector<8x128xf32>
    %113 = arith.addf %111, %112 : vector<8x128xf32>
    %114 = math.rsqrt %113 : vector<8x128xf32>
    %115 = arith.mulf %102, %114 : vector<8x128xf32>
    %116 = arith.mulf %104, %114 : vector<8x128xf32>
    %117 = arith.mulf %105, %114 : vector<8x128xf32>
    %118 = arith.mulf %106, %114 : vector<8x128xf32>
    %119 = arith.mulf %115, %115 : vector<8x128xf32>
    %120 = arith.mulf %116, %116 : vector<8x128xf32>
    %121 = arith.mulf %117, %117 : vector<8x128xf32>
    %122 = arith.mulf %118, %118 : vector<8x128xf32>
    %123 = arith.mulf %115, %116 : vector<8x128xf32>
    %124 = arith.mulf %115, %117 : vector<8x128xf32>
    %125 = arith.mulf %115, %118 : vector<8x128xf32>
    %126 = arith.mulf %116, %117 : vector<8x128xf32>
    %127 = arith.mulf %116, %118 : vector<8x128xf32>
    %128 = arith.mulf %117, %118 : vector<8x128xf32>
    %129 = arith.addf %119, %120 : vector<8x128xf32>
    %130 = arith.subf %129, %121 : vector<8x128xf32>
    %131 = arith.subf %130, %122 : vector<8x128xf32>
    %132 = arith.subf %126, %125 : vector<8x128xf32>
    %cst_25 = arith.constant 2.000000e+00 : f32
    %133 = vector.broadcast %cst_25 : f32 to vector<8x128xf32>
    %134 = arith.mulf %133, %132 : vector<8x128xf32>
    %135 = arith.addf %124, %127 : vector<8x128xf32>
    %cst_26 = arith.constant 2.000000e+00 : f32
    %136 = vector.broadcast %cst_26 : f32 to vector<8x128xf32>
    %137 = arith.mulf %136, %135 : vector<8x128xf32>
    %138 = arith.addf %125, %126 : vector<8x128xf32>
    %cst_27 = arith.constant 2.000000e+00 : f32
    %139 = vector.broadcast %cst_27 : f32 to vector<8x128xf32>
    %140 = arith.mulf %139, %138 : vector<8x128xf32>
    %141 = arith.subf %119, %120 : vector<8x128xf32>
    %142 = arith.addf %141, %121 : vector<8x128xf32>
    %143 = arith.subf %142, %122 : vector<8x128xf32>
    %144 = arith.subf %128, %123 : vector<8x128xf32>
    %cst_28 = arith.constant 2.000000e+00 : f32
    %145 = vector.broadcast %cst_28 : f32 to vector<8x128xf32>
    %146 = arith.mulf %145, %144 : vector<8x128xf32>
    %147 = arith.subf %127, %124 : vector<8x128xf32>
    %cst_29 = arith.constant 2.000000e+00 : f32
    %148 = vector.broadcast %cst_29 : f32 to vector<8x128xf32>
    %149 = arith.mulf %148, %147 : vector<8x128xf32>
    %150 = arith.addf %123, %128 : vector<8x128xf32>
    %cst_30 = arith.constant 2.000000e+00 : f32
    %151 = vector.broadcast %cst_30 : f32 to vector<8x128xf32>
    %152 = arith.mulf %151, %150 : vector<8x128xf32>
    %153 = arith.subf %119, %120 : vector<8x128xf32>
    %154 = arith.subf %153, %121 : vector<8x128xf32>
    %155 = arith.addf %154, %122 : vector<8x128xf32>
    %156 = arith.subf %53, %131 : vector<8x128xf32>
    %157 = arith.mulf %156, %156 : vector<8x128xf32>
    %158 = arith.subf %56, %134 : vector<8x128xf32>
    %159 = arith.mulf %158, %158 : vector<8x128xf32>
    %160 = arith.addf %157, %159 : vector<8x128xf32>
    %161 = arith.subf %59, %137 : vector<8x128xf32>
    %162 = arith.mulf %161, %161 : vector<8x128xf32>
    %163 = arith.addf %160, %162 : vector<8x128xf32>
    %164 = arith.subf %62, %140 : vector<8x128xf32>
    %165 = arith.mulf %164, %164 : vector<8x128xf32>
    %166 = arith.addf %163, %165 : vector<8x128xf32>
    %167 = arith.subf %65, %143 : vector<8x128xf32>
    %168 = arith.mulf %167, %167 : vector<8x128xf32>
    %169 = arith.addf %166, %168 : vector<8x128xf32>
    %170 = arith.subf %68, %146 : vector<8x128xf32>
    %171 = arith.mulf %170, %170 : vector<8x128xf32>
    %172 = arith.addf %169, %171 : vector<8x128xf32>
    %173 = arith.subf %71, %149 : vector<8x128xf32>
    %174 = arith.mulf %173, %173 : vector<8x128xf32>
    %175 = arith.addf %172, %174 : vector<8x128xf32>
    %176 = arith.subf %74, %152 : vector<8x128xf32>
    %177 = arith.mulf %176, %176 : vector<8x128xf32>
    %178 = arith.addf %175, %177 : vector<8x128xf32>
    %179 = arith.subf %77, %155 : vector<8x128xf32>
    %180 = arith.mulf %179, %179 : vector<8x128xf32>
    %181 = arith.addf %178, %180 : vector<8x128xf32>
    %182 = vector.shape_cast %181 : vector<8x128xf32> to vector<1x8x128xf32>
    %cst_31 = arith.constant dense<0.000000e+00> : vector<1xf32>
    %183 = vector.multi_reduction <add>, %182, %cst_31 [1, 2] : vector<1x8x128xf32> to vector<1xf32>
    %184 = vector.shape_cast %183 : vector<1xf32> to vector<1x1x1xf32>
    %185 = vector.extract %184[0, 0, 0] : f32 from vector<1x1x1xf32>
    %cst_32 = arith.constant 4.320000e+02 : f32
    %186 = arith.divf %185, %cst_32 : f32
    %c0_33 = arith.constant 0 : index
    %c0_34 = arith.constant 0 : index
    %187 = memref.load %arg2[%c0_33, %c0_34] : memref<1x2xf32, #tpu.memory_space<smem>>
    memref.store %186, %arg2[%c0_33, %c0_34] : memref<1x2xf32, #tpu.memory_space<smem>>
    %c0_35 = arith.constant 0 : index
    %c0_36 = arith.constant 0 : index
    %c0_37 = arith.constant 0 : index
    %188 = vector.load %arg1[%c0_35, %c0_36, %c0_37] : memref<2x8x128xf32, #tpu.memory_space<vmem>>, vector<1x8x128xf32>
    %189 = vector.shape_cast %188 : vector<1x8x128xf32> to vector<8x128xf32>
    %c1_38 = arith.constant 1 : index
    %c0_39 = arith.constant 0 : index
    %c0_40 = arith.constant 0 : index
    %190 = vector.load %arg1[%c1_38, %c0_39, %c0_40] : memref<2x8x128xf32, #tpu.memory_space<vmem>>, vector<1x8x128xf32>
    %191 = vector.shape_cast %190 : vector<1x8x128xf32> to vector<8x128xf32>
    %192 = arith.subf %189, %191 : vector<8x128xf32>
    %193 = arith.mulf %192, %192 : vector<8x128xf32>
    %194 = vector.shape_cast %193 : vector<8x128xf32> to vector<1x8x128xf32>
    %cst_41 = arith.constant dense<0.000000e+00> : vector<1xf32>
    %195 = vector.multi_reduction <add>, %194, %cst_41 [1, 2] : vector<1x8x128xf32> to vector<1xf32>
    %196 = vector.shape_cast %195 : vector<1xf32> to vector<1x1x1xf32>
    %197 = vector.extract %196[0, 0, 0] : f32 from vector<1x1x1xf32>
    %cst_42 = arith.constant 2.000000e+01 : f32
    %198 = arith.divf %197, %cst_42 : f32
    %c0_43 = arith.constant 0 : index
    %c1_44 = arith.constant 1 : index
    %199 = memref.load %arg2[%c0_43, %c1_44] : memref<1x2xf32, #tpu.memory_space<smem>>
    memref.store %198, %arg2[%c0_43, %c1_44] : memref<1x2xf32, #tpu.memory_space<smem>>
    return
  }
}

</mosaic_0001>

<llo_original>
// kernel: smpl_loss.1
$region0: #{smpl_loss.1}
  #allocation0 [shape = 'u32[]', space=smem, size = 0x4, offset = 0x4, fixed_abs, tag = 'smem constant byte address 0x4 - core index']
  #allocation1 [shape = 'u32[144,128]{1,0:T(1,128)}', space=vmem, size = 0x12000, scoped, tag = 'internal scratch']
  %s0 = inlined_call_operand.vmem [shape: f32[6,8,128], index: 0, kind: input, shape index: {}]
  %s1 = inlined_call_operand.vmem [shape: f32[2,8,128], index: 1, kind: input, shape index: {}]
  %s2 = inlined_call_operand.vmem [shape: f32[1,2], index: 2, kind: output, shape index: {}]
  %s3 = sld [smem:[#allocation0]]
  $region18: #{smpl_loss.1} parent=0
    _
  %s5 = ssub.s32 1, %s3
  %s6 = scalar_select 0, %s5, %s3
  $region1: #{smpl_loss.1} parent=0
    #allocation2 [shape = 'u8[512]{0}', space=smem, size = 0x200, scoped, tag = 'output window, operand 0, single buffered']
    #allocation3 [shape = 's32[1]{0}', space=sflag, size = 0x4, scoped, tag = 'scoped memory for smpl_loss.1']
    %7 = vsyncpa [#allocation3], 0
    // Predicated region
    $region2: #{smpl_loss.1} parent=1 // pred_check
      _
    $region3: #{smpl_loss.1} parent=1 // pred_check_branch
      %9 = sbr.rel (0) target = $region5
    $region4: #{smpl_loss.1} parent=1 // pred_region
      _
    $region5: #{smpl_loss.1} parent=1 // pred_fallthru
      _
    // Predicated region
    $region6: #{smpl_loss.1} parent=1 // pred_check
      _
    $region7: #{smpl_loss.1} parent=1 // pred_check_branch
      %11 = sbr.rel (0) target = $region9
    $region8: #{smpl_loss.1} parent=1 // pred_region
      _
    $region9: #{smpl_loss.1} parent=1 // pred_fallthru
      _
    %v12 = vld [vmem:[%s0] sm:$0xff]
    %s13 = scalar_lea.vmem %s0, 8
    %v14 = vld [vmem:[%s13] sm:$0xff]
    %s15 = scalar_lea.vmem %s0, 16
    %v16 = vld [vmem:[%s15] sm:$0xff]
    %v17 = vadd.f32 %v12, 1e-08
    %v18 = vadd.f32 %v14, 1e-08
    %v19 = vadd.f32 %v16, 1e-08
    %v20 = vmul.f32 %v17, %v17
    %v21 = vmul.f32 %v18, %v18
    %v22 = vadd.f32 %v20, %v21
    %v23 = vmul.f32 %v19, %v19
    %v24 = vadd.f32 %v22, %v23
    %v25 = vrsqrt.pop %v24
    %v26 = vmul.f32 %v24, %v25
    %v27 = vmul.f32 %v12, %v25
    %v28 = vmul.f32 %v14, %v25
    %v29 = vmul.f32 %v16, %v25
    %v30 = vmul.f32 %v26, 0.5
    %v31 = vand.u32 2147483647, %v30
    %vm32 = vcmp.le.f32.partialorder %v31, 0.7853982
    %vm33 = vcmp.lt.s32.totalorder %v30, 0
    %v34 = vand.u32 %v30, 2139095040
    %v35 = vshrl.u32 %v34, 23
    %v36 = vsub.s32 %v35, 127
    %v37 = vand.u32 2147483647, %v30
    %v38 = vand.u32 %v37, 8388607
    %v39 = vor.u32 %v38, 8388608
    %v40 = vsub.s32 0, %v39
    %v41 = vadd.s32 %v36, 1
    %vm42 = vcmp.gt.s32.totalorder %v41, 0
    %v43 = vsel %vm42, %v41, 0
    %v44 = vshrl.u32 %v43, 5
    %v45 = vand.u32 %v43, 31
    %v46 = vsub.s32 32, %v45
    %v47 = vshrl.u32 683565275, %v46
    %v48 = vshll.u32 683565275, %v45
    %v49 = vshrl.u32 2475754826, %v46
    %v50 = vor.u32 %v48, %v49
    %v51 = vshll.u32 2475754826, %v45
    %v52 = vshrl.u32 2131351028, %v46
    %v53 = vor.u32 %v51, %v52
    %v54 = vshll.u32 2131351028, %v45
    %v55 = vshrl.u32 2102212464, %v46
    %v56 = vor.u32 %v54, %v55
    %v57 = vshll.u32 2102212464, %v45
    %v58 = vshrl.u32 920167782, %v46
    %v59 = vor.u32 %v57, %v58
    %v60 = vshll.u32 920167782, %v45
    %v61 = vshrl.u32 1326507024, %v46
    %v62 = vor.u32 %v60, %v61
    %vm63 = vcmp.lt.s32.totalorder %v44, 1
    %vm64 = vcmp.lt.s32.totalorder %v44, 2
    %vm65 = vcmp.lt.s32.totalorder %v44, 3
    %vm66 = vcmp.lt.s32.totalorder %v44, 4
    %v67 = vsel %vm63, %v47, %v50
    %v68 = vsel %vm66, %v56, 2102212464
    %v69 = vsel %vm65, %v53, %v68
    %v70 = vsel %vm64, %v67, %v69
    %v71 = vsel %vm63, %v50, %v53
    %v72 = vsel %vm66, %v59, 920167782
    %v73 = vsel %vm65, %v56, %v72
    %v74 = vsel %vm64, %v71, %v73
    %v75 = vsel %vm63, %v53, %v56
    %v76 = vsel %vm66, %v62, 1326507024
    %v77 = vsel %vm65, %v59, %v76
    %v78 = vsel %vm64, %v75, %v77
    %v79 = vshll.u32 %v39, 8
    %v80 = vmul.u32.u64.compose %v79, %v78
    %v81 = vextract.low.u32 %v80
    %v82 = vextract.high.u32 %v80
    %v83 = vmul.u32.u64.compose %v79, %v74
    %v84 = vextract.low.u32 %v83
    %v85 = vextract.high.u32 %v83
    %v86 = vmul.u32 %v79, %v70
    %v87 = vadd.s32 %v82, %v84
    %vm88 = vc.u32 %v82, %v84
    %v89 = vadd.s32 %v85, 1
    %v90 = vsel %vm88, %v89, %v85
    %v91 = vadd.s32 %v86, %v90
    %v92 = vadd.s32 %v91, 536870912
    %v93 = vshrl.u32 %v92, 30
    %v94 = vshll.u32 %v93, 30
    %v95 = vsub.s32 %v91, %v94
    %vm96 = vcmp.lt.s32.totalorder %v95, 0
    %v97 = vsub.s32 0, %v95
    %v98 = vsel %vm96, %v97, %v95
    %v99 = vclz %v98
    %v100 = vsub.s32 %v99, 2
    %vm101 = vcmp.gt.s32.totalorder 0, %v100
    %v102 = vsel %vm101, 0, %v100
    %v103 = vsub.s32 32, %v102
    %v104 = vshll.u32 %v95, %v102
    %v105 = vshrl.u32 %v87, %v103
    %v106 = vor.u32 %v104, %v105
    %v107 = vsub.s32 4294967266, %v102
    %v108 = vadd.s32 %v107, 127
    %v109 = vshll.u32 %v108, 23
    %v110 = vor.u32 4788187, %v109
    %v111 = vand.u32 2147483647, %v110
    %v113 = vcvt.s32.f32 %v106
    %v114 = vmul.f32 %v113, %v111
    %v115 = vxor.u32 %v114, 2147483648
    %v116 = vsel %vm33, %v115, %v114
    %v117 = vsub.s32 4, %v93
    %v118 = vsel %vm33, %v117, %v93
    %v119 = vsel %vm32, %v30, %v116
    %v120 = vsel %vm32, 0, %v118
    %v121 = vcosq.f32.pop %v119
    %v122 = vsinq.f32.pop %v119
    %vm123 = vweird.f32 %v30
    %v124 = vand.u32 %v120, 3
    %vm125 = vcmp.lt.s32.totalorder %v124, 2
    %vm126 = vcmp.eq.s32.totalorder %v124, 0
    %v127 = vxor.u32 %v122, 2147483648
    %v128 = vsel %vm126, %v121, %v127
    %vm129 = vcmp.eq.s32.totalorder %v124, 2
    %v130 = vxor.u32 %v121, 2147483648
    %v131 = vsel %vm129, %v130, %v122
    %v132 = vsel %vm125, %v128, %v131
    %v133 = vsel %vm123, nan, %v132
    %v134 = vand.u32 2147483647, %v30
    %vm135 = vcmp.le.f32.partialorder %v134, 0.7853982
    %vm136 = vcmp.lt.s32.totalorder %v30, 0
    %v137 = vand.u32 %v30, 2139095040
    %v138 = vshrl.u32 %v137, 23
    %v139 = vsub.s32 %v138, 127
    %v140 = vand.u32 2147483647, %v30
    %v141 = vand.u32 %v140, 8388607
    %v142 = vor.u32 %v141, 8388608
    %v143 = vsub.s32 0, %v142
    %v144 = vadd.s32 %v139, 1
    %vm145 = vcmp.gt.s32.totalorder %v144, 0
    %v146 = vsel %vm145, %v144, 0
    %v147 = vshrl.u32 %v146, 5
    %v148 = vand.u32 %v146, 31
    %v149 = vsub.s32 32, %v148
    %v150 = vshrl.u32 683565275, %v149
    %v151 = vshll.u32 683565275, %v148
    %v152 = vshrl.u32 2475754826, %v149
    %v153 = vor.u32 %v151, %v152
    %v154 = vshll.u32 2475754826, %v148
    %v155 = vshrl.u32 2131351028, %v149
    %v156 = vor.u32 %v154, %v155
    %v157 = vshll.u32 2131351028, %v148
    %v158 = vshrl.u32 2102212464, %v149
    %v159 = vor.u32 %v157, %v158
    %v160 = vshll.u32 2102212464, %v148
    %v161 = vshrl.u32 920167782, %v149
    %v162 = vor.u32 %v160, %v161
    %v163 = vshll.u32 920167782, %v148
    %v164 = vshrl.u32 1326507024, %v149
    %v165 = vor.u32 %v163, %v164
    %vm166 = vcmp.lt.s32.totalorder %v147, 1
    %vm167 = vcmp.lt.s32.totalorder %v147, 2
    %vm168 = vcmp.lt.s32.totalorder %v147, 3
    %vm169 = vcmp.lt.s32.totalorder %v147, 4
    %v170 = vsel %vm166, %v150, %v153
    %v171 = vsel %vm169, %v159, 2102212464
    %v172 = vsel %vm168, %v156, %v171
    %v173 = vsel %vm167, %v170, %v172
    %v174 = vsel %vm166, %v153, %v156
    %v175 = vsel %vm169, %v162, 920167782
    %v176 = vsel %vm168, %v159, %v175
    %v177 = vsel %vm167, %v174, %v176
    %v178 = vsel %vm166, %v156, %v159
    %v179 = vsel %vm169, %v165, 1326507024
    %v180 = vsel %vm168, %v162, %v179
    %v181 = vsel %vm167, %v178, %v180
    %v182 = vshll.u32 %v142, 8
    %v183 = vmul.u32.u64.compose %v182, %v181
    %v184 = vextract.low.u32 %v183
    %v185 = vextract.high.u32 %v183
    %v186 = vmul.u32.u64.compose %v182, %v177
    %v187 = vextract.low.u32 %v186
    %v188 = vextract.high.u32 %v186
    %v189 = vmul.u32 %v182, %v173
    %v190 = vadd.s32 %v185, %v187
    %vm191 = vc.u32 %v185, %v187
    %v192 = vadd.s32 %v188, 1
    %v193 = vsel %vm191, %v192, %v188
    %v194 = vadd.s32 %v189, %v193
    %v195 = vadd.s32 %v194, 536870912
    %v196 = vshrl.u32 %v195, 30
    %v197 = vshll.u32 %v196, 30
    %v198 = vsub.s32 %v194, %v197
    %vm199 = vcmp.lt.s32.totalorder %v198, 0
    %v200 = vsub.s32 0, %v198
    %v201 = vsel %vm199, %v200, %v198
    %v202 = vclz %v201
    %v203 = vsub.s32 %v202, 2
    %vm204 = vcmp.gt.s32.totalorder 0, %v203
    %v205 = vsel %vm204, 0, %v203
    %v206 = vsub.s32 32, %v205
    %v207 = vshll.u32 %v198, %v205
    %v208 = vshrl.u32 %v190, %v206
    %v209 = vor.u32 %v207, %v208
    %v210 = vsub.s32 4294967266, %v205
    %v211 = vadd.s32 %v210, 127
    %v212 = vshll.u32 %v211, 23
    %v213 = vor.u32 4788187, %v212
    %v214 = vand.u32 2147483647, %v213
    %v216 = vcvt.s32.f32 %v209
    %v217 = vmul.f32 %v216, %v214
    %v218 = vxor.u32 %v217, 2147483648
    %v219 = vsel %vm136, %v218, %v217
    %v220 = vsub.s32 4, %v196
    %v221 = vsel %vm136, %v220, %v196
    %v222 = vsel %vm135, %v30, %v219
    %v223 = vsel %vm135, 0, %v221
    %v224 = vcosq.f32.pop %v222
    %v225 = vsinq.f32.pop %v222
    %vm226 = vweird.f32 %v30
    %v227 = vadd.s32 %v223, 3
    %v228 = vand.u32 %v227, 3
    %vm229 = vcmp.lt.s32.totalorder %v228, 2
    %vm230 = vcmp.eq.s32.totalorder %v228, 0
    %v231 = vxor.u32 %v225, 2147483648
    %v232 = vsel %vm230, %v224, %v231
    %vm233 = vcmp.eq.s32.totalorder %v228, 2
    %v234 = vxor.u32 %v224, 2147483648
    %v235 = vsel %vm233, %v234, %v225
    %v236 = vsel %vm229, %v232, %v235
    %v237 = vsel %vm226, nan, %v236
    %v238 = vmul.f32 %v237, %v27
    %v239 = vmul.f32 %v237, %v28
    %v240 = vmul.f32 %v237, %v29
    %v241 = vmul.f32 %v133, %v133
    %v242 = vmul.f32 %v238, %v238
    %v243 = vadd.f32 %v241, %v242
    %v244 = vmul.f32 %v239, %v239
    %v245 = vadd.f32 %v243, %v244
    %v246 = vmul.f32 %v240, %v240
    %v247 = vadd.f32 %v245, %v246
    %v248 = vrsqrt.pop %v247
    %v249 = vmul.f32 %v133, %v248
    %v250 = vmul.f32 %v238, %v248
    %v251 = vmul.f32 %v239, %v248
    %v252 = vmul.f32 %v240, %v248
    %v253 = vmul.f32 %v249, %v249
    %v254 = vmul.f32 %v250, %v250
    %v255 = vmul.f32 %v251, %v251
    %v256 = vmul.f32 %v252, %v252
    %v257 = vmul.f32 %v249, %v250
    %v258 = vmul.f32 %v249, %v251
    %v259 = vmul.f32 %v249, %v252
    %v260 = vmul.f32 %v250, %v251
    %v261 = vmul.f32 %v250, %v252
    %v262 = vmul.f32 %v251, %v252
    %v263 = vadd.f32 %v253, %v254
    %v264 = vsub.f32 %v263, %v255
    %v265 = vsub.f32 %v264, %v256
    %v266 = vsub.f32 %v260, %v259
    %v267 = vmul.f32 %v266, 2.0
    %v268 = vadd.f32 %v258, %v261
    %v269 = vmul.f32 %v268, 2.0
    %v270 = vadd.f32 %v259, %v260
    %v271 = vmul.f32 %v270, 2.0
    %v272 = vsub.f32 %v253, %v254
    %v273 = vadd.f32 %v272, %v255
    %v274 = vsub.f32 %v273, %v256
    %v275 = vsub.f32 %v262, %v257
    %v276 = vmul.f32 %v275, 2.0
    %v277 = vsub.f32 %v261, %v258
    %v278 = vmul.f32 %v277, 2.0
    %v279 = vadd.f32 %v257, %v262
    %v280 = vmul.f32 %v279, 2.0
    %v281 = vsub.f32 %v272, %v255
    %v282 = vadd.f32 %v281, %v256
    %s283 = scalar_lea.vmem %s0, 24
    %v284 = vld [vmem:[%s283] sm:$0xff]
    %s285 = scalar_lea.vmem %s0, 32
    %v286 = vld [vmem:[%s285] sm:$0xff]
    %s287 = scalar_lea.vmem %s0, 40
    %v288 = vld [vmem:[%s287] sm:$0xff]
    %v289 = vadd.f32 %v284, 1e-08
    %v290 = vadd.f32 %v286, 1e-08
    %v291 = vadd.f32 %v288, 1e-08
    %v292 = vmul.f32 %v289, %v289
    %v293 = vmul.f32 %v290, %v290
    %v294 = vadd.f32 %v292, %v293
    %v295 = vmul.f32 %v291, %v291
    %v296 = vadd.f32 %v294, %v295
    %v297 = vrsqrt.pop %v296
    %v298 = vmul.f32 %v296, %v297
    %v299 = vmul.f32 %v284, %v297
    %v300 = vmul.f32 %v286, %v297
    %v301 = vmul.f32 %v288, %v297
    %v302 = vmul.f32 %v298, 0.5
    %v303 = vand.u32 2147483647, %v302
    %vm304 = vcmp.le.f32.partialorder %v303, 0.7853982
    %vm305 = vcmp.lt.s32.totalorder %v302, 0
    %v306 = vand.u32 %v302, 2139095040
    %v307 = vshrl.u32 %v306, 23
    %v308 = vsub.s32 %v307, 127
    %v309 = vand.u32 2147483647, %v302
    %v310 = vand.u32 %v309, 8388607
    %v311 = vor.u32 %v310, 8388608
    %v312 = vsub.s32 0, %v311
    %v313 = vadd.s32 %v308, 1
    %vm314 = vcmp.gt.s32.totalorder %v313, 0
    %v315 = vsel %vm314, %v313, 0
    %v316 = vshrl.u32 %v315, 5
    %v317 = vand.u32 %v315, 31
    %v318 = vsub.s32 32, %v317
    %v319 = vshrl.u32 683565275, %v318
    %v320 = vshll.u32 683565275, %v317
    %v321 = vshrl.u32 2475754826, %v318
    %v322 = vor.u32 %v320, %v321
    %v323 = vshll.u32 2475754826, %v317
    %v324 = vshrl.u32 2131351028, %v318
    %v325 = vor.u32 %v323, %v324
    %v326 = vshll.u32 2131351028, %v317
    %v327 = vshrl.u32 2102212464, %v318
    %v328 = vor.u32 %v326, %v327
    %v329 = vshll.u32 2102212464, %v317
    %v330 = vshrl.u32 920167782, %v318
    %v331 = vor.u32 %v329, %v330
    %v332 = vshll.u32 920167782, %v317
    %v333 = vshrl.u32 1326507024, %v318
    %v334 = vor.u32 %v332, %v333
    %vm335 = vcmp.lt.s32.totalorder %v316, 1
    %vm336 = vcmp.lt.s32.totalorder %v316, 2
    %vm337 = vcmp.lt.s32.totalorder %v316, 3
    %vm338 = vcmp.lt.s32.totalorder %v316, 4
    %v339 = vsel %vm335, %v319, %v322
    %v340 = vsel %vm338, %v328, 2102212464
    %v341 = vsel %vm337, %v325, %v340
    %v342 = vsel %vm336, %v339, %v341
    %v343 = vsel %vm335, %v322, %v325
    %v344 = vsel %vm338, %v331, 920167782
    %v345 = vsel %vm337, %v328, %v344
    %v346 = vsel %vm336, %v343, %v345
    %v347 = vsel %vm335, %v325, %v328
    %v348 = vsel %vm338, %v334, 1326507024
    %v349 = vsel %vm337, %v331, %v348
    %v350 = vsel %vm336, %v347, %v349
    %v351 = vshll.u32 %v311, 8
    %v352 = vmul.u32.u64.compose %v351, %v350
    %v353 = vextract.low.u32 %v352
    %v354 = vextract.high.u32 %v352
    %v355 = vmul.u32.u64.compose %v351, %v346
    %v356 = vextract.low.u32 %v355
    %v357 = vextract.high.u32 %v355
    %v358 = vmul.u32 %v351, %v342
    %v359 = vadd.s32 %v354, %v356
    %vm360 = vc.u32 %v354, %v356
    %v361 = vadd.s32 %v357, 1
    %v362 = vsel %vm360, %v361, %v357
    %v363 = vadd.s32 %v358, %v362
    %v364 = vadd.s32 %v363, 536870912
    %v365 = vshrl.u32 %v364, 30
    %v366 = vshll.u32 %v365, 30
    %v367 = vsub.s32 %v363, %v366
    %vm368 = vcmp.lt.s32.totalorder %v367, 0
    %v369 = vsub.s32 0, %v367
    %v370 = vsel %vm368, %v369, %v367
    %v371 = vclz %v370
    %v372 = vsub.s32 %v371, 2
    %vm373 = vcmp.gt.s32.totalorder 0, %v372
    %v374 = vsel %vm373, 0, %v372
    %v375 = vsub.s32 32, %v374
    %v376 = vshll.u32 %v367, %v374
    %v377 = vshrl.u32 %v359, %v375
    %v378 = vor.u32 %v376, %v377
    %v379 = vsub.s32 4294967266, %v374
    %v380 = vadd.s32 %v379, 127
    %v381 = vshll.u32 %v380, 23
    %v382 = vor.u32 4788187, %v381
    %v383 = vand.u32 2147483647, %v382
    %v385 = vcvt.s32.f32 %v378
    %v386 = vmul.f32 %v385, %v383
    %v387 = vxor.u32 %v386, 2147483648
    %v388 = vsel %vm305, %v387, %v386
    %v389 = vsub.s32 4, %v365
    %v390 = vsel %vm305, %v389, %v365
    %v391 = vsel %vm304, %v302, %v388
    %v392 = vsel %vm304, 0, %v390
    %v393 = vcosq.f32.pop %v391
    %v394 = vsinq.f32.pop %v391
    %vm395 = vweird.f32 %v302
    %v396 = vand.u32 %v392, 3
    %vm397 = vcmp.lt.s32.totalorder %v396, 2
    %vm398 = vcmp.eq.s32.totalorder %v396, 0
    %v399 = vxor.u32 %v394, 2147483648
    %v400 = vsel %vm398, %v393, %v399
    %vm401 = vcmp.eq.s32.totalorder %v396, 2
    %v402 = vxor.u32 %v393, 2147483648
    %v403 = vsel %vm401, %v402, %v394
    %v404 = vsel %vm397, %v400, %v403
    %v405 = vsel %vm395, nan, %v404
    %v406 = vand.u32 2147483647, %v302
    %vm407 = vcmp.le.f32.partialorder %v406, 0.7853982
    %vm408 = vcmp.lt.s32.totalorder %v302, 0
    %v409 = vand.u32 %v302, 2139095040
    %v410 = vshrl.u32 %v409, 23
    %v411 = vsub.s32 %v410, 127
    %v412 = vand.u32 2147483647, %v302
    %v413 = vand.u32 %v412, 8388607
    %v414 = vor.u32 %v413, 8388608
    %v415 = vsub.s32 0, %v414
    %v416 = vadd.s32 %v411, 1
    %vm417 = vcmp.gt.s32.totalorder %v416, 0
    %v418 = vsel %vm417, %v416, 0
    %v419 = vshrl.u32 %v418, 5
    %v420 = vand.u32 %v418, 31
    %v421 = vsub.s32 32, %v420
    %v422 = vshrl.u32 683565275, %v421
    %v423 = vshll.u32 683565275, %v420
    %v424 = vshrl.u32 2475754826, %v421
    %v425 = vor.u32 %v423, %v424
    %v426 = vshll.u32 2475754826, %v420
    %v427 = vshrl.u32 2131351028, %v421
    %v428 = vor.u32 %v426, %v427
    %v429 = vshll.u32 2131351028, %v420
    %v430 = vshrl.u32 2102212464, %v421
    %v431 = vor.u32 %v429, %v430
    %v432 = vshll.u32 2102212464, %v420
    %v433 = vshrl.u32 920167782, %v421
    %v434 = vor.u32 %v432, %v433
    %v435 = vshll.u32 920167782, %v420
    %v436 = vshrl.u32 1326507024, %v421
    %v437 = vor.u32 %v435, %v436
    %vm438 = vcmp.lt.s32.totalorder %v419, 1
    %vm439 = vcmp.lt.s32.totalorder %v419, 2
    %vm440 = vcmp.lt.s32.totalorder %v419, 3
    %vm441 = vcmp.lt.s32.totalorder %v419, 4
    %v442 = vsel %vm438, %v422, %v425
    %v443 = vsel %vm441, %v431, 2102212464
    %v444 = vsel %vm440, %v428, %v443
    %v445 = vsel %vm439, %v442, %v444
    %v446 = vsel %vm438, %v425, %v428
    %v447 = vsel %vm441, %v434, 920167782
    %v448 = vsel %vm440, %v431, %v447
    %v449 = vsel %vm439, %v446, %v448
    %v450 = vsel %vm438, %v428, %v431
    %v451 = vsel %vm441, %v437, 1326507024
    %v452 = vsel %vm440, %v434, %v451
    %v453 = vsel %vm439, %v450, %v452
    %v454 = vshll.u32 %v414, 8
    %v455 = vmul.u32.u64.compose %v454, %v453
    %v456 = vextract.low.u32 %v455
    %v457 = vextract.high.u32 %v455
    %v458 = vmul.u32.u64.compose %v454, %v449
    %v459 = vextract.low.u32 %v458
    %v460 = vextract.high.u32 %v458
    %v461 = vmul.u32 %v454, %v445
    %v462 = vadd.s32 %v457, %v459
    %vm463 = vc.u32 %v457, %v459
    %v464 = vadd.s32 %v460, 1
    %v465 = vsel %vm463, %v464, %v460
    %v466 = vadd.s32 %v461, %v465
    %v467 = vadd.s32 %v466, 536870912
    %v468 = vshrl.u32 %v467, 30
    %v469 = vshll.u32 %v468, 30
    %v470 = vsub.s32 %v466, %v469
    %vm471 = vcmp.lt.s32.totalorder %v470, 0
    %v472 = vsub.s32 0, %v470
    %v473 = vsel %vm471, %v472, %v470
    %v474 = vclz %v473
    %v475 = vsub.s32 %v474, 2
    %vm476 = vcmp.gt.s32.totalorder 0, %v475
    %v477 = vsel %vm476, 0, %v475
    %v478 = vsub.s32 32, %v477
    %v479 = vshll.u32 %v470, %v477
    %v480 = vshrl.u32 %v462, %v478
    %v481 = vor.u32 %v479, %v480
    %v482 = vsub.s32 4294967266, %v477
    %v483 = vadd.s32 %v482, 127
    %v484 = vshll.u32 %v483, 23
    %v485 = vor.u32 4788187, %v484
    %v486 = vand.u32 2147483647, %v485
    %v488 = vcvt.s32.f32 %v481
    %v489 = vmul.f32 %v488, %v486
    %v490 = vxor.u32 %v489, 2147483648
    %v491 = vsel %vm408, %v490, %v489
    %v492 = vsub.s32 4, %v468
    %v493 = vsel %vm408, %v492, %v468
    %v494 = vsel %vm407, %v302, %v491
    %v495 = vsel %vm407, 0, %v493
    %v496 = vcosq.f32.pop %v494
    %v497 = vsinq.f32.pop %v494
    %vm498 = vweird.f32 %v302
    %v499 = vadd.s32 %v495, 3
    %v500 = vand.u32 %v499, 3
    %vm501 = vcmp.lt.s32.totalorder %v500, 2
    %vm502 = vcmp.eq.s32.totalorder %v500, 0
    %v503 = vxor.u32 %v497, 2147483648
    %v504 = vsel %vm502, %v496, %v503
    %vm505 = vcmp.eq.s32.totalorder %v500, 2
    %v506 = vxor.u32 %v496, 2147483648
    %v507 = vsel %vm505, %v506, %v497
    %v508 = vsel %vm501, %v504, %v507
    %v509 = vsel %vm498, nan, %v508
    %v510 = vmul.f32 %v509, %v299
    %v511 = vmul.f32 %v509, %v300
    %v512 = vmul.f32 %v509, %v301
    %v513 = vmul.f32 %v405, %v405
    %v514 = vmul.f32 %v510, %v510
    %v515 = vadd.f32 %v513, %v514
    %v516 = vmul.f32 %v511, %v511
    %v517 = vadd.f32 %v515, %v516
    %v518 = vmul.f32 %v512, %v512
    %v519 = vadd.f32 %v517, %v518
    %v520 = vrsqrt.pop %v519
    %v521 = vmul.f32 %v405, %v520
    %v522 = vmul.f32 %v510, %v520
    %v523 = vmul.f32 %v511, %v520
    %v524 = vmul.f32 %v512, %v520
    %v525 = vmul.f32 %v521, %v521
    %v526 = vmul.f32 %v522, %v522
    %v527 = vmul.f32 %v523, %v523
    %v528 = vmul.f32 %v524, %v524
    %v529 = vmul.f32 %v521, %v522
    %v530 = vmul.f32 %v521, %v523
    %v531 = vmul.f32 %v521, %v524
    %v532 = vmul.f32 %v522, %v523
    %v533 = vmul.f32 %v522, %v524
    %v534 = vmul.f32 %v523, %v524
    %v535 = vadd.f32 %v525, %v526
    %v536 = vsub.f32 %v535, %v527
    %v537 = vsub.f32 %v536, %v528
    %v538 = vsub.f32 %v532, %v531
    %v539 = vmul.f32 %v538, 2.0
    %v540 = vadd.f32 %v530, %v533
    %v541 = vmul.f32 %v540, 2.0
    %v542 = vadd.f32 %v531, %v532
    %v543 = vmul.f32 %v542, 2.0
    %v544 = vsub.f32 %v525, %v526
    %v545 = vadd.f32 %v544, %v527
    %v546 = vsub.f32 %v545, %v528
    %v547 = vsub.f32 %v534, %v529
    %v548 = vmul.f32 %v547, 2.0
    %v549 = vsub.f32 %v533, %v530
    %v550 = vmul.f32 %v549, 2.0
    %v551 = vadd.f32 %v529, %v534
    %v552 = vmul.f32 %v551, 2.0
    %v553 = vsub.f32 %v544, %v527
    %v554 = vadd.f32 %v553, %v528
    %v555 = vsub.f32 %v265, %v537
    %v556 = vmul.f32 %v555, %v555
    %v557 = vsub.f32 %v267, %v539
    %v558 = vmul.f32 %v557, %v557
    %v559 = vadd.f32 %v556, %v558
    %v560 = vsub.f32 %v269, %v541
    %v561 = vmul.f32 %v560, %v560
    %v562 = vadd.f32 %v559, %v561
    %v563 = vsub.f32 %v271, %v543
    %v564 = vmul.f32 %v563, %v563
    %v565 = vadd.f32 %v562, %v564
    %v566 = vsub.f32 %v274, %v546
    %v567 = vmul.f32 %v566, %v566
    %v568 = vadd.f32 %v565, %v567
    %v569 = vsub.f32 %v276, %v548
    %v570 = vmul.f32 %v569, %v569
    %v571 = vadd.f32 %v568, %v570
    %v572 = vsub.f32 %v278, %v550
    %v573 = vmul.f32 %v572, %v572
    %v574 = vadd.f32 %v571, %v573
    %v575 = vsub.f32 %v280, %v552
    %v576 = vmul.f32 %v575, %v575
    %v577 = vadd.f32 %v574, %v576
    %v578 = vsub.f32 %v282, %v554
    %v579 = vmul.f32 %v578, %v578
    %v580 = vadd.f32 %v577, %v579
    %581 = vadd.xlane.f32.xlu0 %v580
    %v582 = vpop.xlane.xlu0 %581
    %v583 = vrot.slane %v582, 4
    %v584 = vadd.f32 %v582, %v583
    %v585 = vrot.slane %v584, 2
    %v586 = vadd.f32 %v584, %v585
    %v587 = vrot.slane %v586, 1
    %v588 = vadd.f32 %v586, %v587
    %s589 = vtos %v588
    %v590 = vrcp.pop 432.0
    %s591 = vtos %v590
    %s592 = smul.f32 %s589, %s591
    %s593 = scalar_lea.smem [#allocation2], 0
    %594 = sst [smem:[%s593]] %s592
    %v595 = vld [vmem:[%s1] sm:$0xff]
    %s596 = scalar_lea.vmem %s1, 8
    %v597 = vld [vmem:[%s596] sm:$0xff]
    %v598 = vsub.f32 %v595, %v597
    %v599 = vmul.f32 %v598, %v598
    %600 = vadd.xlane.f32.xlu0 %v599
    %v601 = vpop.xlane.xlu0 %600
    %v602 = vrot.slane %v601, 4
    %v603 = vadd.f32 %v601, %v602
    %v604 = vrot.slane %v603, 2
    %v605 = vadd.f32 %v603, %v604
    %v606 = vrot.slane %v605, 1
    %v607 = vadd.f32 %v605, %v606
    %s608 = vtos %v607
    %v609 = vrcp.pop 20.0
    %s610 = vtos %v609
    %s611 = smul.f32 %s608, %s610
    %s612 = scalar_lea.smem [#allocation2], 1
    %613 = sst [smem:[%s612]] %s611
    // Predicated region
    $region10: #{smpl_loss.1} parent=1 // pred_check
      _
    $region11: #{smpl_loss.1} parent=1 // pred_check_branch
      %615 = sbr.rel (0) target = $region13
    $region12: #{smpl_loss.1} parent=1 // pred_region
      %s617 = ssub.s32 16, 16
      %618 = vsyncadd [#allocation3], %s617
      %s620 = sshll.u32 %s2, 4
      %s621 = int_to_ptr.vmem [resolvable:$true] %s620
      %623 = dma.smem_to_vmem [#allocation2], 16, %s621, [#allocation3]
    $region13: #{smpl_loss.1} parent=1 // pred_fallthru
      _
    // Predicated region
    $region14: #{smpl_loss.1} parent=1 // pred_check
      _
    $region15: #{smpl_loss.1} parent=1 // pred_check_branch
      %625 = sbr.rel (0) target = $region17
    $region16: #{smpl_loss.1} parent=1 // pred_region
      %626 = dma.done [#allocation3], 16
    $region17: #{smpl_loss.1} parent=1 // pred_fallthru
      _
    %627 = sfence
    %628 = vsyncpa [#allocation3], 1

</llo_original>
